<compile_context>
chip_gen: v7x
topology: tpu7x:2x2x1
jax: 0.10.0
libtpu: 0.0.40
codegen_flags: <defaults>
</compile_context>

<pallas_src>
import jax
import jax.numpy as jnp
from jax.experimental import pallas as pl
from jax.experimental.pallas import tpu as pltpu

F32 = jnp.float32
BF16 = jnp.bfloat16


def _round_up(a, b):
    return (a + b - 1) // b * b


def _pad2(a, shape, dtype):
    out = jnp.zeros(shape, dtype)
    return out.at[: a.shape[0], : a.shape[1]].set(a.astype(dtype))


# ---------------- kernel 1: z1 = sanitize(x) @ W1 (row-tiled) ----------------
def _feat1_kernel(x_ref, w1_ref, z1_ref):
    x = x_ref[...]
    x = jnp.where(jnp.isnan(x) | jnp.isinf(x), jnp.zeros_like(x), x)
    z = jnp.dot(x, w1_ref[...], preferred_element_type=F32)
    z1_ref[...] = z.astype(z1_ref.dtype)


# -------- kernel 2: GCN1 aggregate + bias + BN(eval) + ReLU + GAT linear -----
def _gcn1_bn_gat_kernel(anorm_ref, z1_ref, b1_ref, scale_ref, shift_ref,
                        wgat_ref, hg_ref):
    h = jnp.dot(anorm_ref[...], z1_ref[...], preferred_element_type=F32)
    h = h + b1_ref[...]
    h = h * scale_ref[...] + shift_ref[...]       # BatchNorm1d (eval, folded affine)
    h = jnp.maximum(h, 0.0)                       # ReLU
    hg = jnp.dot(h.astype(BF16), wgat_ref[...], preferred_element_type=F32)
    hg_ref[...] = hg.astype(hg_ref.dtype)


# ----- kernel 3: GAT attention + aggregate + bias + ReLU, then GCN2 linear ---
def _gat_attn_gcn2_kernel(anorm_ref, hgf_ref, hgr_ref, asrc_ref, adst_ref,
                          gatb_ref, w2_ref, z2_ref):
    hg_full = hgf_ref[...]                                          # (Np, HP) bf16
    # attention scores on the VPU (no (N,H) transpose, no width-1 matmul)
    s_src = jnp.sum(hg_full.astype(F32) * asrc_ref[...], axis=-1,
                    keepdims=True)                                  # (Np, 1)
    s_dst = jnp.sum(hgr_ref[...].astype(F32) * adst_ref[...], axis=-1,
                    keepdims=True)                                  # (TM, 1)
    e = s_dst + jnp.transpose(s_src)                                # e[i,j] (TM, Np)
    e = jnp.where(e > 0, e, 0.2 * e)                                # LeakyReLU(0.2)
    mask = anorm_ref[...] > 0                                       # edges + self-loops
    e = jnp.where(mask, e, F32(-1e30))
    e = e - jnp.max(e, axis=-1, keepdims=True)
    p = jnp.exp(e)                                                  # ~0 on non-edges
    alpha = p * pl.reciprocal(jnp.sum(p, axis=-1, keepdims=True), approx=True)
    h = jnp.dot(alpha.astype(BF16), hg_full, preferred_element_type=F32)
    h = jnp.maximum(h + gatb_ref[...], 0.0)                         # + bias, ReLU
    z2 = jnp.dot(h.astype(BF16), w2_ref[...], preferred_element_type=F32)
    z2_ref[...] = z2.astype(z2_ref.dtype)


# ------ kernel 4: GCN2 aggregate + bias, Dropout(identity), GCN3 linear ------
def _gcn2_agg_gcn3_feat_kernel(anorm_ref, z2_ref, b2_ref, w3_ref, z3_ref):
    h = jnp.dot(anorm_ref[...], z2_ref[...], preferred_element_type=F32)
    h = h + b2_ref[...]
    # Dropout(0.2) is identity in eval mode.
    z3 = jnp.dot(h.astype(BF16), w3_ref[...], preferred_element_type=F32)
    z3_ref[...] = z3.astype(z3_ref.dtype)


# ---------------- kernel 5: GCN3 aggregate + bias ----------------------------
def _gcn3_agg_kernel(anorm_ref, z3_ref, b3_ref, out_ref):
    out = jnp.dot(anorm_ref[...], z3_ref[...], preferred_element_type=F32)
    out_ref[...] = (out + b3_ref[...]).astype(out_ref.dtype)


# ---------------- plain-JAX glue ---------------------------------------------
def build_dense_adj(edge_index, edge_weight, num_nodes):
    """Dense weighted adjacency with self-loops + GCN symmetric normalization."""
    src = edge_index[0]
    dst = edge_index[1]
    a = jnp.zeros((num_nodes, num_nodes), F32)
    a = a.at[dst, src].add(edge_weight.astype(F32))   # PyG aggregates src -> dst
    a = a + jnp.eye(num_nodes, dtype=F32)             # self-loops, weight 1
    deg = jnp.sum(a, axis=1)
    dinv = jnp.where(deg > 0, 1.0 / jnp.sqrt(deg), 0.0)
    return dinv[:, None] * a * dinv[None, :]


def init_params(key, input_dim, hidden_dim, output_dim):
    ks = jax.random.split(key, 6)
    s = 0.1
    return dict(
        w1=jax.random.normal(ks[0], (input_dim, hidden_dim), F32) * s,
        b1=jnp.zeros((1, hidden_dim), F32),
        gamma=jnp.ones((1, hidden_dim), F32),
        beta=jnp.zeros((1, hidden_dim), F32),
        running_mean=jnp.zeros((1, hidden_dim), F32),
        running_var=jnp.ones((1, hidden_dim), F32),
        gatw=jax.random.normal(ks[1], (hidden_dim, hidden_dim), F32) * s,
        asrc=jax.random.normal(ks[2], (1, hidden_dim), F32) * s,
        adst=jax.random.normal(ks[3], (hidden_dim, 1), F32) * s,
        gatb=jnp.zeros((1, hidden_dim), F32),
        w2=jax.random.normal(ks[4], (hidden_dim, hidden_dim), F32) * s,
        b2=jnp.zeros((1, hidden_dim), F32),
        w3=jax.random.normal(ks[5], (hidden_dim, output_dim), F32) * s,
        b3=jnp.zeros((1, output_dim), F32),
    )


def gcn_model_forward(x, edge_index, edge_weight, params, *, tile_rows=256):
    n, fin = x.shape
    hid = params["w1"].shape[1]
    outd = params["w3"].shape[1]
    hp = _round_up(hid, 128)         # hidden padded to lane width
    op = _round_up(outd, 128)        # output padded to lane width

    tm = _round_up(max(16, min(tile_rows, n)), 16)   # row tile (bf16-sublane friendly)
    npad = _round_up(n, tm)
    grid = (npad // tm,)

    # dense normalized adjacency (scatter-add glue), padded + cast to bf16
    anorm = build_dense_adj(edge_index, edge_weight, n)
    anorm_p = _pad2(anorm, (npad, npad), BF16)
    x_p = _pad2(x.astype(F32), (npad, fin), F32)

    # fold BatchNorm1d (eval) running stats into an affine scale/shift
    eps = 1e-5
    scale = params["gamma"] / jnp.sqrt(params["running_var"] + eps)
    shift = params["beta"] - params["running_mean"] * scale

    w1 = _pad2(params["w1"], (fin, hp), F32)          # tiny K=fin matmul: keep f32
    b1 = _pad2(params["b1"], (1, hp), F32)
    bscale = _pad2(scale, (1, hp), F32)
    bshift = _pad2(shift, (1, hp), F32)
    wgat = _pad2(params["gatw"], (hp, hp), BF16)
    asrc = _pad2(params["asrc"], (1, hp), F32)
    adst = _pad2(params["adst"].T, (1, hp), F32)
    gatb = _pad2(params["gatb"], (1, hp), F32)
    w2 = _pad2(params["w2"], (hp, hp), BF16)
    b2 = _pad2(params["b2"], (1, hp), F32)
    w3 = _pad2(params["w3"], (hp, op), BF16)
    b3 = _pad2(params["b3"], (1, op), F32)

    row = lambda i: (i, 0)
    full = lambda i: (0, 0)
    cparams = pltpu.CompilerParams(
        dimension_semantics=("parallel",),
        vmem_limit_bytes=48 * 1024 * 1024,
    )

    def cost(flops, bytes_accessed, transcendentals=0):
        return pl.CostEstimate(flops=int(flops),
                               transcendentals=int(transcendentals),
                               bytes_accessed=int(bytes_accessed))

    # K1: z1 = sanitize(x) @ W1
    z1 = pl.pallas_call(
        _feat1_kernel,
        out_shape=jax.ShapeDtypeStruct((npad, hp), BF16),
        grid=grid,
        in_specs=[pl.BlockSpec((tm, fin), row),
                  pl.BlockSpec((fin, hp), full)],
        out_specs=pl.BlockSpec((tm, hp), row),
        compiler_params=cparams,
        cost_estimate=cost(2 * npad * fin * hp,
                           npad * fin * 4 + fin * hp * 4 + npad * hp * 2),
    )(x_p, w1)

    # K2: hg = relu(bn(anorm @ z1 + b1)) @ Wgat
    hg = pl.pallas_call(
        _gcn1_bn_gat_kernel,
        out_shape=jax.ShapeDtypeStruct((npad, hp), BF16),
        grid=grid,
        in_specs=[pl.BlockSpec((tm, npad), row),
                  pl.BlockSpec((npad, hp), full),
                  pl.BlockSpec((1, hp), full),
                  pl.BlockSpec((1, hp), full),
                  pl.BlockSpec((1, hp), full),
                  pl.BlockSpec((hp, hp), full)],
        out_specs=pl.BlockSpec((tm, hp), row),
        compiler_params=cparams,
        cost_estimate=cost(2 * npad * npad * hp + 2 * npad * hp * hp,
                           npad * npad * 2 + 2 * npad * hp * 2 + hp * hp * 2),
    )(anorm_p, z1, b1, bscale, bshift, wgat)

    # K3: GAT attention (mask derived from anorm rows) + aggregate + ReLU, then @ W2
    z2 = pl.pallas_call(
        _gat_attn_gcn2_kernel,
        out_shape=jax.ShapeDtypeStruct((npad, hp), BF16),
        grid=grid,
        in_specs=[pl.BlockSpec((tm, npad), row),     # anorm rows -> edge mask
                  pl.BlockSpec((npad, hp), full),    # hg (full, resident)
                  pl.BlockSpec((tm, hp), row),       # hg (row tile)
                  pl.BlockSpec((1, hp), full),       # a_src
                  pl.BlockSpec((1, hp), full),       # a_dst
                  pl.BlockSpec((1, hp), full),       # gat bias
                  pl.BlockSpec((hp, hp), full)],     # W2
        out_specs=pl.BlockSpec((tm, hp), row),
        compiler_params=cparams,
        cost_estimate=cost(2 * npad * npad * hp + 2 * npad * hp * hp
                           + 6 * npad * npad,
                           npad * npad * 2 + 3 * npad * hp * 2 + hp * hp * 2,
                           transcendentals=npad * npad),
    )(anorm_p, hg, hg, asrc, adst, gatb, w2)

    # K4: h = anorm @ z2 + b2 ; Dropout(identity) ; z3 = h @ W3
    z3 = pl.pallas_call(
        _gcn2_agg_gcn3_feat_kernel,
        out_shape=jax.ShapeDtypeStruct((npad, op), BF16),
        grid=grid,
        in_specs=[pl.BlockSpec((tm, npad), row),
                  pl.BlockSpec((npad, hp), full),
                  pl.BlockSpec((1, hp), full),
                  pl.BlockSpec((hp, op), full)],
        out_specs=pl.BlockSpec((tm, op), row),
        compiler_params=cparams,
        cost_estimate=cost(2 * npad * npad * hp + 2 * npad * hp * op,
                           npad * npad * 2 + npad * hp * 2 + hp * op * 2
                           + npad * op * 2),
    )(anorm_p, z2, b2, w3)

    # K5: out = anorm @ z3 + b3
    out = pl.pallas_call(
        _gcn3_agg_kernel,
        out_shape=jax.ShapeDtypeStruct((npad, op), F32),
        grid=grid,
        in_specs=[pl.BlockSpec((tm, npad), row),
                  pl.BlockSpec((npad, op), full),
                  pl.BlockSpec((1, op), full)],
        out_specs=pl.BlockSpec((tm, op), row),
        compiler_params=cparams,
        cost_estimate=cost(2 * npad * npad * op,
                           npad * npad * 2 + npad * op * 2 + npad * op * 4),
    )(anorm_p, z3, b3)

    return out[:n, :outd]


if __name__ == "__main__":
    N, E = 64, 256
    input_dim, hidden_dim, output_dim = 8, 32, 4

    key = jax.random.PRNGKey(0)
    kx, ks, ko, kw, kp = jax.random.split(key, 5)

    x = jax.random.normal(kx, (N, input_dim), F32)
    # inject NaN / Inf to exercise the sanitization path
    x = x.at[0, 0].set(jnp.nan)
    x = x.at[1, 1].set(jnp.inf)

    src = jax.random.randint(ks, (E,), 0, N)
    off = jax.random.randint(ko, (E,), 1, N)
    dst = (src + off) % N                       # no self-loops in edge_index
    edge_index = jnp.stack([src, dst]).astype(jnp.int32)
    edge_weight = jax.random.uniform(kw, (E,), F32, 0.5, 1.5)

    params = init_params(kp, input_dim, hidden_dim, output_dim)

    # tile_rows=16 -> 4-step row grid at N=64, exercising the tiled pipeline
    out = gcn_model_forward(x, edge_index, edge_weight, params, tile_rows=16)
    out = jax.block_until_ready(out)
    assert out.shape == (N, output_dim)
    assert bool(jnp.all(jnp.isfinite(out)))
    print("KERNEL_OK")
</pallas_src>

<mosaic_0001>
module attributes {stable_mosaic.version = 11 : i64} {
  func.func @_feat1_kernel(%arg0: i32, %arg1: memref<16x8xf32, #tpu.memory_space<vmem>>, %arg2: memref<8x128xf32, #tpu.memory_space<vmem>>, %arg3: memref<16x128xbf16, #tpu.memory_space<vmem>>) attributes {dimension_semantics = [#tpu.dimension_semantics<parallel>], iteration_bounds = array<i64: 4>, scalar_prefetch = 0 : i64, scratch_operands = 0 : i64, tpu.core_type = #tpu.core_type<tc>, window_params = [{transform_indices = @transform_0, window_bounds = array<i64: 16, 8>}, {pipeline_mode = #tpu.pipeline_mode<synchronous>, transform_indices = @transform_1, window_bounds = array<i64: 8, 128>}, {transform_indices = @transform_2, window_bounds = array<i64: 16, 128>}]} {
    %c0 = arith.constant 0 : index
    %c0_0 = arith.constant 0 : index
    %0 = vector.load %arg1[%c0, %c0_0] : memref<16x8xf32, #tpu.memory_space<vmem>>, vector<16x8xf32>
    %1 = arith.cmpf one, %0, %0 : vector<16x8xf32>
    %2 = math.absf %0 : vector<16x8xf32>
    %cst = arith.constant 0x7F800000 : f32
    %3 = vector.broadcast %cst : f32 to vector<16x8xf32>
    %4 = arith.cmpf oeq, %2, %3 : vector<16x8xf32>
    %5 = arith.ori %1, %4 : vector<16x8xi1>
    %cst_1 = arith.constant 0.000000e+00 : f32
    %6 = vector.broadcast %cst_1 : f32 to vector<16x8xf32>
    %7 = arith.select %5, %6, %0 : vector<16x8xi1>, vector<16x8xf32>
    %c0_2 = arith.constant 0 : index
    %c0_3 = arith.constant 0 : index
    %8 = vector.load %arg2[%c0_2, %c0_3] : memref<8x128xf32, #tpu.memory_space<vmem>>, vector<8x128xf32>
    %cst_4 = arith.constant dense<0.000000e+00> : vector<16x128xf32>
    %9 = tpu.matmul %7, %8, %cst_4 {dimension_numbers = #tpu.dot_dimension_numbers<[1], [0], [0], [1], [0, 0, 1, 1], [], []>} : vector<16x8xf32>, vector<8x128xf32>, vector<16x128xf32> -> vector<16x128xf32>
    %10 = arith.truncf %9 : vector<16x128xf32> to vector<16x128xbf16>
    %c0_5 = arith.constant 0 : index
    %c0_6 = arith.constant 0 : index
    %11 = vector.load %arg3[%c0_5, %c0_6] : memref<16x128xbf16, #tpu.memory_space<vmem>>, vector<16x128xbf16>
    tpu.vector_store %arg3[%c0_5, %c0_6], %10 {strides = array<i32>} : memref<16x128xbf16, #tpu.memory_space<vmem>>, vector<16x128xbf16>,
    return
  }
  func.func @transform_0(%arg0: i32) -> (i32, i32) {
    %c0_i32 = arith.constant 0 : i32
    %c0_i32_0 = arith.constant 0 : i32
    return %arg0, %c0_i32 : i32, i32
  }
  func.func @transform_1(%arg0: i32) -> (i32, i32) {
    %c0_i32 = arith.constant 0 : i32
    %c0_i32_0 = arith.constant 0 : i32
    %c0_i32_1 = arith.constant 0 : i32
    return %c0_i32, %c0_i32_0 : i32, i32
  }
  func.func @transform_2(%arg0: i32) -> (i32, i32) {
    %c0_i32 = arith.constant 0 : i32
    %c0_i32_0 = arith.constant 0 : i32
    return %arg0, %c0_i32 : i32, i32
  }
}

</mosaic_0001>

<llo_original>
// kernel: tpu_custom_call.1
$region0: #{tpu_custom_call.1}
  #allocation0 [shape = 'u32[]', space=smem, size = 0x4, offset = 0x4, fixed_abs, tag = 'smem constant byte address 0x4 - core index']
  #allocation1 [shape = 'u32[144,128]{1,0:T(1,128)}', space=vmem, size = 0x12000, scoped, tag = 'internal scratch']
  %s0 = inlined_call_operand.vmem [shape: f32[64,8], index: 0, kind: input, shape index: {}]
  %s1 = inlined_call_operand.vmem [shape: f32[8,128], index: 1, kind: input, shape index: {}]
  %s2 = inlined_call_operand.hbm [shape: bf16[64,128], index: 2, kind: output, shape index: {}]
  %s3 = sld [smem:[#allocation0]]
  $region41: #{tpu_custom_call.1} parent=0
    _
  %s5 = ssub.s32 1, %s3
  %s6 = scalar_select 0, %s5, %s3
  $region1: #{tpu_custom_call.1} parent=0
    #allocation2 [shape = 'u8[8192]{0}', space=vmem, size = 0x2000, scoped, tag = 'output window, operand 0']
    #allocation3 [shape = 's32[2]{0}', space=sflag, size = 0x8, scoped, tag = 'scoped memory for tpu_custom_call.1']
    %7 = vsyncpa [#allocation3], 0
    %s8 = scalar_lea.sflag [#allocation3], 1
    %9 = vsyncpa %s8, 0
    loop: start=0, step=1, limit=6
    $region2: #{tpu_custom_call.1} parent=1 // loop_pre_header
      _
    $region3: #{tpu_custom_call.1} parent=1 // loop_header
      %s11 = sphi 0, %s15
      %p12 = scmp.ge.s32.totalorder %s11, 6
      %s21 = sphi 0, %s23
      %s24 = sphi 0, %s21
      %s25 = sphi 0, %s24
      %s41 = sphi 0, %s25
      %s45 = sphi 0, %s45
      %s47 = sphi 0, %s45
      %s48 = sphi 0, %s47
      %s62 = sphi 0, %s48
      %s68 = sphi 0, %s70
      %s71 = sphi 0, %s68
      %s72 = sphi 0, %s71
      %s88 = sphi 0, %s72
    $region4: #{tpu_custom_call.1} parent=1 // loop_header_branch
      %14 = sbr.rel (%p12) target = $region8
    $region5: #{tpu_custom_call.1} parent=1 // loop_body
      %s16 = ssub.s32 %s11, 1
      %s17 = ssub.s32 %s11, 2
      %s18 = sadd.s32 %s11, 1
      %s19 = ssub.s32 %s11, %s18
      %p20 = scmp.eq.s32.totalorder %s19, 0
      %s22 = sadd.s32 %s21, 1
      %s23 = scalar_select %p20, %s21, %s22
      %p26 = pneg %p20
      %p27 = scmp.eq.s32.totalorder %s11, 3
      %p28 = por %p26, %p27
      %p29 = scmp.ne.s32.totalorder %s21, %s24
      %p30 = scmp.eq.s32.totalorder %s11, 0
      %p31 = por %p29, %p30
      %p32 = scmp.ne.s32.totalorder %s21, %s24
      %p33 = scmp.eq.s32.totalorder %s16, 3
      %p34 = por %p32, %p33
      %p35 = scmp.ne.s32.totalorder %s24, %s25
      %p36 = scmp.eq.s32.totalorder %s16, 0
      %p37 = por %p35, %p36
      %p38 = scmp.ne.s32.totalorder %s24, %s25
      %p39 = scmp.eq.s32.totalorder %s17, 3
      %p40 = por %p38, %p39
      %p42 = scmp.ne.s32.totalorder %s25, %s41
      %p43 = scmp.eq.s32.totalorder %s17, 0
      %p44 = por %p42, %p43
      %s46 = sadd.s32 %s45, 1
      %p49 = scmp.eq.s32.totalorder %s11, 3
      %p50 = scmp.ne.s32.totalorder %s45, %s47
      %p51 = scmp.eq.s32.totalorder %s11, 0
      %p52 = por %p50, %p51
      %p53 = scmp.ne.s32.totalorder %s45, %s47
      %p54 = scmp.eq.s32.totalorder %s16, 3
      %p55 = por %p53, %p54
      %p56 = scmp.ne.s32.totalorder %s47, %s48
      %p57 = scmp.eq.s32.totalorder %s16, 0
      %p58 = por %p56, %p57
      %p59 = scmp.ne.s32.totalorder %s47, %s48
      %p60 = scmp.eq.s32.totalorder %s17, 3
      %p61 = por %p59, %p60
      %p63 = scmp.ne.s32.totalorder %s48, %s62
      %p64 = scmp.eq.s32.totalorder %s17, 0
      %p65 = por %p63, %p64
      %s66 = ssub.s32 %s11, %s18
      %p67 = scmp.eq.s32.totalorder %s66, 0
      %s69 = sadd.s32 %s68, 1
      %s70 = scalar_select %p67, %s68, %s69
      %p73 = pneg %p67
      %p74 = scmp.eq.s32.totalorder %s11, 3
      %p75 = por %p73, %p74
      %p76 = scmp.ne.s32.totalorder %s68, %s71
      %p77 = scmp.eq.s32.totalorder %s11, 0
      %p78 = por %p76, %p77
      %p79 = scmp.ne.s32.totalorder %s68, %s71
      %p80 = scmp.eq.s32.totalorder %s16, 3
      %p81 = por %p79, %p80
      %p82 = scmp.ne.s32.totalorder %s71, %s72
      %p83 = scmp.eq.s32.totalorder %s16, 0
      %p84 = por %p82, %p83
      %p85 = scmp.ne.s32.totalorder %s71, %s72
      %p86 = scmp.eq.s32.totalorder %s17, 3
      %p87 = por %p85, %p86
      %p89 = scmp.ne.s32.totalorder %s72, %s88
      %p90 = scmp.eq.s32.totalorder %s17, 0
      %p91 = por %p89, %p90
      %p92 = scmp.le.s32.totalorder 1, %s11
      %p93 = scmp.lt.s32.totalorder %s11, 5
      %p94 = pnand %p92, %p93
      %p95 = pneg %p94
      // Predicated region
      $region9: #{tpu_custom_call.1} parent=5 // pred_check
        _
      $region10: #{tpu_custom_call.1} parent=5 // pred_check_branch
        %97 = sbr.rel (%p94) target = $region12
      $region11: #{tpu_custom_call.1} parent=5 // pred_region
        %s98 = ssub.s32 %s11, 1
        // Predicated region
        $region13: #{tpu_custom_call.1} parent=11 // pred_check
          %p99 = pneg %p58
        $region14: #{tpu_custom_call.1} parent=11 // pred_check_branch
          %101 = sbr.rel (%p99) target = $region16
        $region15: #{tpu_custom_call.1} parent=11 // pred_region
          _
        $region16: #{tpu_custom_call.1} parent=11 // pred_fallthru
          _
      $region12: #{tpu_custom_call.1} parent=5 // pred_fallthru
        _
      %p102 = scmp.lt.s32.totalorder %s11, 4
      // Predicated region
      $region17: #{tpu_custom_call.1} parent=5 // pred_check
        %p103 = pneg %p102
      $region18: #{tpu_custom_call.1} parent=5 // pred_check_branch
        %105 = sbr.rel (%p103) target = $region20
      $region19: #{tpu_custom_call.1} parent=5 // pred_region
        // Predicated region
        $region21: #{tpu_custom_call.1} parent=19 // pred_check
          %p106 = pneg %p31
        $region22: #{tpu_custom_call.1} parent=19 // pred_check_branch
          %108 = sbr.rel (%p106) target = $region24
        $region23: #{tpu_custom_call.1} parent=19 // pred_region
          %s109 = smul.u32 2, %s11
          %p110 = scmp.lt.s32.totalorder %s109, 7
          %s111 = scalar_select %p110, %s109, 7
          %s112 = smul.addr %s111, 8
          %s113 = scalar_lea.vmem %s0, %s112
          %s114 = smul.u32 2, %s11
        $region24: #{tpu_custom_call.1} parent=19 // pred_fallthru
          _
      $region20: #{tpu_custom_call.1} parent=5 // pred_fallthru
        _
      %p115 = scmp.le.s32.totalorder 1, %s11
      %p116 = scmp.lt.s32.totalorder %s11, 5
      %p117 = pnand %p115, %p116
      %p118 = pneg %p117
      // Predicated region
      $region25: #{tpu_custom_call.1} parent=5 // pred_check
        _
      $region26: #{tpu_custom_call.1} parent=5 // pred_check_branch
        %120 = sbr.rel (%p117) target = $region28
      $region27: #{tpu_custom_call.1} parent=5 // pred_region
        %s121 = ssub.s32 %s11, 1
        %s122 = smul.u32 2, %s16
        %p123 = scmp.lt.s32.totalorder %s122, 7
        %s124 = scalar_select %p123, %s122, 7
        %s125 = smul.addr %s124, 8
        %s126 = scalar_lea.vmem %s0, %s125
        %p127 = pneg %p37
        %p128 = pneg %p34
        %p129 = pneg %p58
        %p130 = pneg %p55
        %p131 = pneg %p84
        %p132 = pneg %p81
        %s133 = sand.u32 %s71, 1
        %s134 = scalar_lea.sflag [#allocation3], %s133
        %s135 = sand.u32 %s71, 1
        %s136 = smul.addr %s135, 8
        %s137 = scalar_lea.vmem [#allocation2], %s136
        %s138 = smul.u32 2, %s16
        %p139 = scmp.lt.s32.totalorder %s138, 7
        %s140 = scalar_select %p139, %s138, 7
        %s141 = smul.addr %s140, 8
        %s142 = scalar_lea.vmem %s0, %s141
        %s143 = smul.u32 2, %s16
        %s144 = smul.u32 2, %s16
        %v145 = vld [vmem:[%s142] sm:$0xff]
        %v146 = vld [vmem:[%s142 + $0x8] sm:$0xff]
        %vm147 = vcmp.ne.f32.partialorder %v145, %v145
        %vm148 = vcmp.ne.f32.partialorder %v146, %v146
        %v149 = vand.u32 2147483647, %v145
        %v150 = vand.u32 2147483647, %v146
        %vm151 = vcmp.eq.f32.partialorder %v149, inf
        %vm152 = vcmp.eq.f32.partialorder %v150, inf
        %vm153 = vmor %vm147, %vm151
        %vm154 = vmor %vm148, %vm152
        %v155 = vsel %vm153, 0.0, %v145
        %v156 = vsel %vm154, 0.0, %v146
        %v157 = vld [vmem:[%s1] sm:$0xff]
        %vm158 = vcmask 64512
        %v160 = vsel %vm158, %v155, 0
        %v163 = vsel %vm158, %v156, 0
        %165 = vmatprep.subr.mxu0 0.0
        %166 = vmatpush1.msra.mxu0 %v157
        %167 = vmatprep.subr.mxu0 0.0
        %168 = vmatpush1.msra.mxu0 0.0
        %169 = vmatprep.subr.mxu0 0.0
        %170 = vmatpush1.msra.mxu0 0.0
        %171 = vmatprep.subr.mxu0 0.0
        %172 = vmatpush1.msra.mxu0 0.0
        %173 = vmatprep.subr.mxu0 0.0
        %174 = vmatpush1.msra.mxu0 0.0
        %175 = vmatprep.subr.mxu0 0.0
        %176 = vmatpush1.msra.mxu0 0.0
        %177 = vmatprep.subr.mxu0 0.0
        %178 = vmatpush1.msra.mxu0 0.0
        %179 = vmatprep.subr.mxu0 0.0
        %180 = vmatpush1.msra.mxu0 0.0
        %181 = vmatprep.subr.mxu0 0.0
        %182 = vmatpush1.msra.mxu0 0.0
        %183 = vmatprep.subr.mxu0 0.0
        %184 = vmatpush1.msra.mxu0 0.0
        %185 = vmatprep.subr.mxu0 0.0
        %186 = vmatpush1.msra.mxu0 0.0
        %187 = vmatprep.subr.mxu0 0.0
        %188 = vmatpush1.msra.mxu0 0.0
        %189 = vmatprep.subr.mxu0 0.0
        %190 = vmatpush1.msra.mxu0 0.0
        %191 = vmatprep.subr.mxu0 0.0
        %192 = vmatpush1.msra.mxu0 0.0
        %193 = vmatprep.subr.mxu0 0.0
        %194 = vmatpush1.msra.mxu0 0.0
        %195 = vmatprep.subr.mxu0 0.0
        %196 = vmatpush1.msra.mxu0 0.0
        %197 = vmatprep.subr.mxu0 0.0
        %198 = vmatpush1.msra.mxu0 0.0
        %199 = vmatprep.subr.mxu0 0.0
        %200 = vmatpush1.msra.mxu0 0.0
        %201 = vmatprep.subr.mxu0 0.0
        %202 = vmatpush1.msra.mxu0 0.0
        %203 = vmatprep.subr.mxu0 0.0
        %204 = vmatpush1.msra.mxu0 0.0
        %205 = vmatprep.subr.mxu0 0.0
        %206 = vmatpush1.msra.mxu0 0.0
        %207 = vmatprep.subr.mxu0 0.0
        %208 = vmatpush1.msra.mxu0 0.0
        %209 = vmatprep.subr.mxu0 0.0
        %210 = vmatpush1.msra.mxu0 0.0
        %211 = vmatprep.subr.mxu0 0.0
        %212 = vmatpush1.msra.mxu0 0.0
        %213 = vmatprep.subr.mxu0 0.0
        %214 = vmatpush1.msra.mxu0 0.0
        %215 = vmatprep.subr.mxu0 0.0
        %216 = vmatpush1.msra.mxu0 0.0
        %217 = vmatprep.subr.mxu0 0.0
        %218 = vmatpush1.msra.mxu0 0.0
        %219 = vmatprep.subr.mxu0 0.0
        %220 = vmatpush1.msra.mxu0 0.0
        %221 = vmatprep.subr.mxu0 0.0
        %222 = vmatpush1.msra.mxu0 0.0
        %223 = vmatprep.subr.mxu0 0.0
        %224 = vmatpush1.msra.mxu0 0.0
        %225 = vmatprep.subr.mxu0 0.0
        %226 = vmatpush1.msra.mxu0 0.0
        %227 = vmatprep.subr.mxu0 0.0
        %228 = vmatpush1.msra.mxu0 0.0
        %229 = vmatprep.mubr.f32.mxu0 0.0
        %230 = vmatmul.mubr.f32.gmra.mrb[0].mxu0 %v160
        %v231 = vpop.f32.mrb[0].mxu0
        %v232 = vadd.f32 0.0, %v231
        %v233 = vpop.f32.mrb[0].mxu0
        %234 = vmatprep.mubr.f32.mxu0 0.0
        %235 = vmatmul.mubr.f32.gmra.mrb[0].mxu0 %v163
        %v236 = vpop.f32.mrb[0].mxu0
        %v237 = vadd.f32 0.0, %v236
        %v238 = vpop.f32.mrb[0].mxu0
        %239 = vdwg.mxu0
        %v240 = vpack.c.bf16 %v237, %v232
        %v242 = vunpack.c.l.b16 %v240
        %v243 = vunpack.c.h.b16 %v240
        %v244 = vpack.c.b16 %v242, %v242
        %v245 = vpack.c.b16 %v243, %v243
        %248 = vst [vmem:[%s137] sm:$0xf] %v244
        %249 = vst [vmem:[%s137 + $0x4] sm:$0xf] %v245
        %s250 = sand.u32 %s71, 1
        %s251 = scalar_lea.sflag [#allocation3], %s250
        %s252 = sand.u32 %s71, 1
        %s253 = smul.addr %s252, 8
        %s254 = scalar_lea.vmem [#allocation2], %s253
        // Predicated region
        $region29: #{tpu_custom_call.1} parent=27 // pred_check
          %p255 = pneg %p81
        $region30: #{tpu_custom_call.1} parent=27 // pred_check_branch
          %257 = sbr.rel (%p255) target = $region32
        $region31: #{tpu_custom_call.1} parent=27 // pred_region
          %s258 = smul.u32 2, %s16
          %s260 = ssub.s32 128, 128
          %261 = vsyncadd %s251, %s260
          %s262 = smul.addr %s258, 64
          %s263 = scalar_lea.hbm %s2, %s262
          %s264 = sshll.u32 %s254, 4
          %s265 = int_to_ptr.vmem [resolvable:$true] %s264
          %270 = dma.vmem_to_hbm [thread:$0]  %s265, 128, %s263, %s251, 64, 64, 4
        $region32: #{tpu_custom_call.1} parent=27 // pred_fallthru
          _
      $region28: #{tpu_custom_call.1} parent=5 // pred_fallthru
        _
      %p271 = scmp.le.s32.totalorder 2, %s11
      // Predicated region
      $region33: #{tpu_custom_call.1} parent=5 // pred_check
        %p272 = pneg %p271
      $region34: #{tpu_custom_call.1} parent=5 // pred_check_branch
        %274 = sbr.rel (%p272) target = $region36
      $region35: #{tpu_custom_call.1} parent=5 // pred_region
        %s275 = ssub.s32 %s11, 2
        // Predicated region
        $region37: #{tpu_custom_call.1} parent=35 // pred_check
          %p276 = pneg %p87
        $region38: #{tpu_custom_call.1} parent=35 // pred_check_branch
          %278 = sbr.rel (%p276) target = $region40
        $region39: #{tpu_custom_call.1} parent=35 // pred_region
          %s279 = sand.u32 %s72, 1
          %s280 = scalar_lea.sflag [#allocation3], %s279
          %s281 = sand.u32 %s72, 1
          %s282 = smul.addr %s281, 8
          %s283 = scalar_lea.vmem [#allocation2], %s282
          %284 = dma.done %s280, 128
        $region40: #{tpu_custom_call.1} parent=35 // pred_fallthru
          _
      $region36: #{tpu_custom_call.1} parent=5 // pred_fallthru
        _
    $region6: #{tpu_custom_call.1} parent=1 // loop_footer
      %s15 = sadd.s32 1, %s11
    $region7: #{tpu_custom_call.1} parent=1 // loop_footer_branch
      %10 = sbr.rel target = $region3
    $region8: #{tpu_custom_call.1} parent=1 // loop_exit
      _
    %285 = vsyncpa [#allocation3], 1
    %s286 = scalar_lea.sflag [#allocation3], 1
    %287 = vsyncpa %s286, 1

</llo_original>
